<compile_context>
chip_gen: v6e
topology: v6e:2x2x1
jax: 0.10.0
libtpu: 0.0.40
codegen_flags: <defaults>
</compile_context>

<pallas_src>
import functools

import numpy as np
import jax
import jax.numpy as jnp
from jax.experimental import pallas as pl
from jax.experimental.pallas import tpu as pltpu

EPS = 1e-5  # PyTorch BatchNorm1d default


# ---------------------------------------------------------------------------
# Pallas kernel: whole forward pass on a (C, P) slab resident in VMEM
# ---------------------------------------------------------------------------
def encoder_residual_kernel(x_ref, w1_ref, w2_ref, w3_ref, pcp_ref, o_ref,
                            *, L, n_valid):
    """x_ref:   (C, P)  activations, P = N*L padded up to a multiple of 128
       w*_ref:  (C, 3C) stacked-tap conv weights [w(l-1) | w(l) | w(l+1)]
       pcp_ref: (C, 4)  packed per-channel vectors [b1 | b3 | gamma | beta]
    """
    x = x_ref[...]                      # (C, P) f32
    P = x.shape[1]

    # Column masks (computed once, broadcast over channels).
    pos = jax.lax.broadcasted_iota(jnp.int32, (1, P), 1)
    not_first = (pos % L) != 0          # a left neighbour exists in-sample
    not_last = (pos % L) != (L - 1)     # a right neighbour exists in-sample
    valid = pos < n_valid               # real (non lane-padding) columns

    b1 = pcp_ref[:, 0:1]
    b3 = pcp_ref[:, 1:2]
    gamma = pcp_ref[:, 2:3]
    beta = pcp_ref[:, 3:4]

    def conv(h, w_stacked, bias=None):
        # Conv1d(k=3, pad=1) as a single (C,3C) x (3C,P) MXU contraction.
        h_lm1 = jnp.where(not_first, pltpu.roll(h, shift=1, axis=1), 0.0)
        h_lp1 = jnp.where(not_last, pltpu.roll(h, shift=P - 1, axis=1), 0.0)
        h3 = jnp.concatenate([h_lm1, h, h_lp1], axis=0)            # (3C, P)
        y = jnp.dot(w_stacked, h3, preferred_element_type=jnp.float32)
        if bias is not None:
            y = y + bias
        return y

    # conv1 -> conv2 (conv2 bias dropped: cancels exactly in batch-norm)
    h = conv(x, w1_ref[...], b1)
    h = conv(h, w2_ref[...])

    # BatchNorm1d, training-mode (biased) batch statistics per channel,
    # single pass over valid columns, folded into one scale + shift.
    hv = jnp.where(valid, h, 0.0)
    inv_n = 1.0 / n_valid
    mean = jnp.sum(hv, axis=1, keepdims=True) * inv_n
    ex2 = jnp.sum(hv * hv, axis=1, keepdims=True) * inv_n
    var = ex2 - mean * mean
    scale = gamma * jax.lax.rsqrt(var + EPS)
    shift = beta - mean * scale
    h = h * scale + shift

    # Swish
    h = h * jax.nn.sigmoid(h)

    # conv3 + residual
    h = conv(h, w3_ref[...], b3)
    o_ref[...] = x + 0.1 * h


# ---------------------------------------------------------------------------
# Wrapper: layout plumbing + pallas_call
# ---------------------------------------------------------------------------
def encoder_residual_block(x, params):
    """x: (N, C, L) float32.  params as produced by init_params."""
    (w1, b1), (w2, _b2), (w3, b3), gamma, beta = params
    N, C, L = x.shape
    nl = N * L
    P = ((nl + 127) // 128) * 128        # lane-dense padded width

    # (N, C, L) -> (C, N*L), pad lanes to a multiple of 128.
    x2 = jnp.transpose(x, (1, 0, 2)).reshape(C, nl)
    x2 = jnp.pad(x2, ((0, 0), (0, P - nl)))

    # Stack the three taps of each (C, C, 3) kernel into one (C, 3C) matrix.
    stack = lambda w: jnp.concatenate([w[:, :, 0], w[:, :, 1], w[:, :, 2]], axis=1)
    # Pack per-channel vectors into a single small operand (b2 is dropped).
    pcp = jnp.stack([b1, b3, gamma, beta], axis=1)                 # (C, 4)

    kernel = functools.partial(encoder_residual_kernel, L=L, n_valid=nl)

    flops = int(3 * 2 * C * (3 * C) * P)                 # 3 stacked-tap matmuls
    bytes_accessed = int((2 * C * P + 3 * C * 3 * C + C * 4) * 4)
    cost = pl.CostEstimate(flops=flops,
                           transcendentals=int(C * P),   # sigmoid
                           bytes_accessed=bytes_accessed)

    vmem = pl.BlockSpec(memory_space=pltpu.MemorySpace.VMEM)
    out = pl.pallas_call(
        kernel,
        out_shape=jax.ShapeDtypeStruct((C, P), jnp.float32),
        in_specs=[vmem] * 5,
        out_specs=vmem,
        cost_estimate=cost,
    )(x2, stack(w1), stack(w2), stack(w3), pcp)

    # Undo the layout: (C, P) -> (N, C, L)
    return out[:, :nl].reshape(C, N, L).transpose(1, 0, 2)


# ---------------------------------------------------------------------------
# Deterministic parameter init (PyTorch-style uniform bounds, synthetic)
# ---------------------------------------------------------------------------
def init_params(key, dim):
    ks = jax.random.split(key, 6)

    def conv_init(kw, kb):
        fan_in = dim * 3
        bound = 1.0 / np.sqrt(fan_in)
        w = jax.random.uniform(kw, (dim, dim, 3), jnp.float32, -bound, bound)
        b = jax.random.uniform(kb, (dim,), jnp.float32, -bound, bound)
        return w, b

    c1 = conv_init(ks[0], ks[1])
    c2 = conv_init(ks[2], ks[3])
    c3 = conv_init(ks[4], ks[5])
    gamma = jnp.ones((dim,), jnp.float32)
    beta = jnp.zeros((dim,), jnp.float32)
    return (c1, c2, c3, gamma, beta)


# ---------------------------------------------------------------------------
# Pure-JAX reference (mirrors the PyTorch forward) for a sanity check
# ---------------------------------------------------------------------------
def reference(x, params):
    (w1, b1), (w2, b2), (w3, b3), gamma, beta = params

    def conv(h, w, b):
        y = jax.lax.conv_general_dilated(
            h, w, window_strides=(1,), padding=[(1, 1)],
            dimension_numbers=("NCH", "OIH", "NCH"),
        )
        return y + b[None, :, None]

    h = conv(x, w1, b1)
    h = conv(h, w2, b2)
    mean = jnp.mean(h, axis=(0, 2), keepdims=True)
    var = jnp.mean(jnp.square(h - mean), axis=(0, 2), keepdims=True)
    h = (h - mean) / jnp.sqrt(var + EPS)
    h = h * gamma[None, :, None] + beta[None, :, None]
    h = h * jax.nn.sigmoid(h)
    h = conv(h, w3, b3)
    return x + 0.1 * h


if __name__ == "__main__":
    N, C, L = 2, 8, 16  # batch, dim (channels), sequence length
    key = jax.random.PRNGKey(0)
    kx, kp = jax.random.split(key)

    x = jax.random.normal(kx, (N, C, L), dtype=jnp.float32)
    params = init_params(kp, C)

    out = jax.block_until_ready(encoder_residual_block(x, params))
    ref = jax.block_until_ready(reference(x, params))
    np.testing.assert_allclose(np.asarray(out), np.asarray(ref),
                               rtol=1e-4, atol=1e-4)

    print("KERNEL_OK")
</pallas_src>

<mosaic_0001>
module attributes {stable_mosaic.version = 11 : i64} {
  func.func @encoder_residual_kernel(%arg0: memref<8x128xf32, #tpu.memory_space<vmem>>, %arg1: memref<8x24xf32, #tpu.memory_space<vmem>>, %arg2: memref<8x24xf32, #tpu.memory_space<vmem>>, %arg3: memref<8x24xf32, #tpu.memory_space<vmem>>, %arg4: memref<8x4xf32, #tpu.memory_space<vmem>>, %arg5: memref<8x128xf32, #tpu.memory_space<vmem>>) attributes {dimension_semantics = [], scalar_prefetch = 0 : i64, scratch_operands = 0 : i64, tpu.core_type = #tpu.core_type<tc>} {
    %c0 = arith.constant 0 : index
    %c0_0 = arith.constant 0 : index
    %0 = vector.load %arg0[%c0, %c0_0] : memref<8x128xf32, #tpu.memory_space<vmem>>, vector<8x128xf32>
    %1 = tpu.iota {dimensions = array<i32: 1>} : vector<1x128xi32>
    %c16_i32 = arith.constant 16 : i32
    %c0_i32 = arith.constant 0 : i32
    %2 = arith.cmpi eq, %c16_i32, %c0_i32 : i32
    %c1_i32 = arith.constant 1 : i32
    %3 = arith.select %2, %c1_i32, %c16_i32 : i32
    %4 = vector.broadcast %3 : i32 to vector<1x128xi32>
    %5 = arith.remsi %1, %4 : vector<1x128xi32>
    %c0_i32_1 = arith.constant 0 : i32
    %6 = vector.broadcast %c0_i32_1 : i32 to vector<1x128xi32>
    %7 = arith.cmpi ne, %5, %6 : vector<1x128xi32>
    %c0_i32_2 = arith.constant 0 : i32
    %8 = vector.broadcast %c0_i32_2 : i32 to vector<1x128xi32>
    %9 = arith.cmpi slt, %5, %8 : vector<1x128xi32>
    %c0_i32_3 = arith.constant 0 : i32
    %10 = arith.cmpi slt, %3, %c0_i32_3 : i32
    %11 = vector.broadcast %10 : i1 to vector<1x128xi1>
    %12 = vector.broadcast %11 : vector<1x128xi1> to vector<1x128xi1>
    %13 = arith.xori %9, %12 : vector<1x128xi1>
    %14 = arith.andi %13, %7 : vector<1x128xi1>
    %15 = vector.broadcast %3 : i32 to vector<1x128xi32>
    %16 = arith.addi %5, %15 : vector<1x128xi32>
    %17 = arith.select %14, %16, %5 : vector<1x128xi1>, vector<1x128xi32>
    %c0_i32_4 = arith.constant 0 : i32
    %18 = vector.broadcast %c0_i32_4 : i32 to vector<1x128xi32>
    %19 = arith.cmpi ne, %17, %18 : vector<1x128xi32>
    %c16_i32_5 = arith.constant 16 : i32
    %c0_i32_6 = arith.constant 0 : i32
    %20 = arith.cmpi eq, %c16_i32_5, %c0_i32_6 : i32
    %c1_i32_7 = arith.constant 1 : i32
    %21 = arith.select %20, %c1_i32_7, %c16_i32_5 : i32
    %22 = vector.broadcast %21 : i32 to vector<1x128xi32>
    %23 = arith.remsi %1, %22 : vector<1x128xi32>
    %c0_i32_8 = arith.constant 0 : i32
    %24 = vector.broadcast %c0_i32_8 : i32 to vector<1x128xi32>
    %25 = arith.cmpi ne, %23, %24 : vector<1x128xi32>
    %c0_i32_9 = arith.constant 0 : i32
    %26 = vector.broadcast %c0_i32_9 : i32 to vector<1x128xi32>
    %27 = arith.cmpi slt, %23, %26 : vector<1x128xi32>
    %c0_i32_10 = arith.constant 0 : i32
    %28 = arith.cmpi slt, %21, %c0_i32_10 : i32
    %29 = vector.broadcast %28 : i1 to vector<1x128xi1>
    %30 = vector.broadcast %29 : vector<1x128xi1> to vector<1x128xi1>
    %31 = arith.xori %27, %30 : vector<1x128xi1>
    %32 = arith.andi %31, %25 : vector<1x128xi1>
    %33 = vector.broadcast %21 : i32 to vector<1x128xi32>
    %34 = arith.addi %23, %33 : vector<1x128xi32>
    %35 = arith.select %32, %34, %23 : vector<1x128xi1>, vector<1x128xi32>
    %c15_i32 = arith.constant 15 : i32
    %36 = vector.broadcast %c15_i32 : i32 to vector<1x128xi32>
    %37 = arith.cmpi ne, %35, %36 : vector<1x128xi32>
    %c32_i32 = arith.constant 32 : i32
    %38 = vector.broadcast %c32_i32 : i32 to vector<1x128xi32>
    %39 = arith.cmpi slt, %1, %38 : vector<1x128xi32>
    %c0_11 = arith.constant 0 : index
    %c0_12 = arith.constant 0 : index
    %40 = vector.load %arg4[%c0_11, %c0_12] : memref<8x4xf32, #tpu.memory_space<vmem>>, vector<8x1xf32>
    %c0_13 = arith.constant 0 : index
    %c1 = arith.constant 1 : index
    %41 = vector.load %arg4[%c0_13, %c1] : memref<8x4xf32, #tpu.memory_space<vmem>>, vector<8x1xf32>
    %c0_14 = arith.constant 0 : index
    %c2 = arith.constant 2 : index
    %42 = vector.load %arg4[%c0_14, %c2] : memref<8x4xf32, #tpu.memory_space<vmem>>, vector<8x1xf32>
    %c0_15 = arith.constant 0 : index
    %c3 = arith.constant 3 : index
    %43 = vector.load %arg4[%c0_15, %c3] : memref<8x4xf32, #tpu.memory_space<vmem>>, vector<8x1xf32>
    %c0_16 = arith.constant 0 : index
    %c0_17 = arith.constant 0 : index
    %44 = vector.load %arg1[%c0_16, %c0_17] : memref<8x24xf32, #tpu.memory_space<vmem>>, vector<8x24xf32>
    %c1_i32_18 = arith.constant 1 : i32
    %45 = tpu.dynamic_rotate %0 by %c1_i32_18 dim 1 : vector<8x128xf32>, i32 -> vector<8x128xf32>
    %cst = arith.constant 0.000000e+00 : f32
    %46 = vector.shape_cast %19 : vector<1x128xi1> to vector<1x128xi1>
    %47 = vector.broadcast %46 : vector<1x128xi1> to vector<8x128xi1>
    %48 = vector.broadcast %cst : f32 to vector<8x128xf32>
    %49 = arith.select %47, %45, %48 : vector<8x128xi1>, vector<8x128xf32>
    %c127_i32 = arith.constant 127 : i32
    %50 = tpu.dynamic_rotate %0 by %c127_i32 dim 1 : vector<8x128xf32>, i32 -> vector<8x128xf32>
    %cst_19 = arith.constant 0.000000e+00 : f32
    %51 = vector.shape_cast %37 : vector<1x128xi1> to vector<1x128xi1>
    %52 = vector.broadcast %51 : vector<1x128xi1> to vector<8x128xi1>
    %53 = vector.broadcast %cst_19 : f32 to vector<8x128xf32>
    %54 = arith.select %52, %50, %53 : vector<8x128xi1>, vector<8x128xf32>
    %55 = tpu.concatenate %49, %0, %54 in 0 : vector<8x128xf32>, vector<8x128xf32>, vector<8x128xf32> -> vector<24x128xf32>
    %cst_20 = arith.constant dense<0.000000e+00> : vector<8x128xf32>
    %56 = tpu.matmul %44, %55, %cst_20 {dimension_numbers = #tpu.dot_dimension_numbers<[1], [0], [0], [1], [0, 0, 1, 1], [], []>} : vector<8x24xf32>, vector<24x128xf32>, vector<8x128xf32> -> vector<8x128xf32>
    %57 = vector.broadcast %40 : vector<8x1xf32> to vector<8x128xf32>
    %58 = arith.addf %56, %57 : vector<8x128xf32>
    %c0_21 = arith.constant 0 : index
    %c0_22 = arith.constant 0 : index
    %59 = vector.load %arg2[%c0_21, %c0_22] : memref<8x24xf32, #tpu.memory_space<vmem>>, vector<8x24xf32>
    %c1_i32_23 = arith.constant 1 : i32
    %60 = tpu.dynamic_rotate %58 by %c1_i32_23 dim 1 : vector<8x128xf32>, i32 -> vector<8x128xf32>
    %cst_24 = arith.constant 0.000000e+00 : f32
    %61 = vector.shape_cast %19 : vector<1x128xi1> to vector<1x128xi1>
    %62 = vector.broadcast %61 : vector<1x128xi1> to vector<8x128xi1>
    %63 = vector.broadcast %cst_24 : f32 to vector<8x128xf32>
    %64 = arith.select %62, %60, %63 : vector<8x128xi1>, vector<8x128xf32>
    %c127_i32_25 = arith.constant 127 : i32
    %65 = tpu.dynamic_rotate %58 by %c127_i32_25 dim 1 : vector<8x128xf32>, i32 -> vector<8x128xf32>
    %cst_26 = arith.constant 0.000000e+00 : f32
    %66 = vector.shape_cast %37 : vector<1x128xi1> to vector<1x128xi1>
    %67 = vector.broadcast %66 : vector<1x128xi1> to vector<8x128xi1>
    %68 = vector.broadcast %cst_26 : f32 to vector<8x128xf32>
    %69 = arith.select %67, %65, %68 : vector<8x128xi1>, vector<8x128xf32>
    %70 = tpu.concatenate %64, %58, %69 in 0 : vector<8x128xf32>, vector<8x128xf32>, vector<8x128xf32> -> vector<24x128xf32>
    %cst_27 = arith.constant dense<0.000000e+00> : vector<8x128xf32>
    %71 = tpu.matmul %59, %70, %cst_27 {dimension_numbers = #tpu.dot_dimension_numbers<[1], [0], [0], [1], [0, 0, 1, 1], [], []>} : vector<8x24xf32>, vector<24x128xf32>, vector<8x128xf32> -> vector<8x128xf32>
    %cst_28 = arith.constant 0.000000e+00 : f32
    %72 = vector.shape_cast %39 : vector<1x128xi1> to vector<1x128xi1>
    %73 = vector.broadcast %72 : vector<1x128xi1> to vector<8x128xi1>
    %74 = vector.broadcast %cst_28 : f32 to vector<8x128xf32>
    %75 = arith.select %73, %71, %74 : vector<8x128xi1>, vector<8x128xf32>
    %cst_29 = arith.constant dense<0.000000e+00> : vector<8xf32>
    %76 = vector.multi_reduction <add>, %75, %cst_29 [1] : vector<8x128xf32> to vector<8xf32>
    %77 = vector.shape_cast %76 : vector<8xf32> to vector<8x1xf32>
    %cst_30 = arith.constant 3.125000e-02 : f32
    %78 = vector.broadcast %cst_30 : f32 to vector<8x1xf32>
    %79 = arith.mulf %77, %78 : vector<8x1xf32>
    %80 = arith.mulf %75, %75 : vector<8x128xf32>
    %cst_31 = arith.constant dense<0.000000e+00> : vector<8xf32>
    %81 = vector.multi_reduction <add>, %80, %cst_31 [1] : vector<8x128xf32> to vector<8xf32>
    %82 = vector.shape_cast %81 : vector<8xf32> to vector<8x1xf32>
    %cst_32 = arith.constant 3.125000e-02 : f32
    %83 = vector.broadcast %cst_32 : f32 to vector<8x1xf32>
    %84 = arith.mulf %82, %83 : vector<8x1xf32>
    %85 = arith.mulf %79, %79 : vector<8x1xf32>
    %86 = arith.subf %84, %85 : vector<8x1xf32>
    %cst_33 = arith.constant 9.99999974E-6 : f32
    %87 = vector.broadcast %cst_33 : f32 to vector<8x1xf32>
    %88 = arith.addf %86, %87 : vector<8x1xf32>
    %89 = math.rsqrt %88 : vector<8x1xf32>
    %90 = arith.mulf %42, %89 : vector<8x1xf32>
    %91 = arith.mulf %79, %90 : vector<8x1xf32>
    %92 = arith.subf %43, %91 : vector<8x1xf32>
    %93 = vector.broadcast %90 : vector<8x1xf32> to vector<8x128xf32>
    %94 = arith.mulf %71, %93 : vector<8x128xf32>
    %95 = vector.broadcast %92 : vector<8x1xf32> to vector<8x128xf32>
    %96 = arith.addf %94, %95 : vector<8x128xf32>
    %97 = arith.negf %96 : vector<8x128xf32>
    %98 = math.exp %97 : vector<8x128xf32>
    %cst_34 = arith.constant 1.000000e+00 : f32
    %99 = vector.broadcast %cst_34 : f32 to vector<8x128xf32>
    %100 = arith.addf %99, %98 : vector<8x128xf32>
    %101 = arith.divf %99, %100 : vector<8x128xf32>
    %102 = arith.mulf %96, %101 : vector<8x128xf32>
    %c0_35 = arith.constant 0 : index
    %c0_36 = arith.constant 0 : index
    %103 = vector.load %arg3[%c0_35, %c0_36] : memref<8x24xf32, #tpu.memory_space<vmem>>, vector<8x24xf32>
    %c1_i32_37 = arith.constant 1 : i32
    %104 = tpu.dynamic_rotate %102 by %c1_i32_37 dim 1 : vector<8x128xf32>, i32 -> vector<8x128xf32>
    %cst_38 = arith.constant 0.000000e+00 : f32
    %105 = vector.shape_cast %19 : vector<1x128xi1> to vector<1x128xi1>
    %106 = vector.broadcast %105 : vector<1x128xi1> to vector<8x128xi1>
    %107 = vector.broadcast %cst_38 : f32 to vector<8x128xf32>
    %108 = arith.select %106, %104, %107 : vector<8x128xi1>, vector<8x128xf32>
    %c127_i32_39 = arith.constant 127 : i32
    %109 = tpu.dynamic_rotate %102 by %c127_i32_39 dim 1 : vector<8x128xf32>, i32 -> vector<8x128xf32>
    %cst_40 = arith.constant 0.000000e+00 : f32
    %110 = vector.shape_cast %37 : vector<1x128xi1> to vector<1x128xi1>
    %111 = vector.broadcast %110 : vector<1x128xi1> to vector<8x128xi1>
    %112 = vector.broadcast %cst_40 : f32 to vector<8x128xf32>
    %113 = arith.select %111, %109, %112 : vector<8x128xi1>, vector<8x128xf32>
    %114 = tpu.concatenate %108, %102, %113 in 0 : vector<8x128xf32>, vector<8x128xf32>, vector<8x128xf32> -> vector<24x128xf32>
    %cst_41 = arith.constant dense<0.000000e+00> : vector<8x128xf32>
    %115 = tpu.matmul %103, %114, %cst_41 {dimension_numbers = #tpu.dot_dimension_numbers<[1], [0], [0], [1], [0, 0, 1, 1], [], []>} : vector<8x24xf32>, vector<24x128xf32>, vector<8x128xf32> -> vector<8x128xf32>
    %116 = vector.broadcast %41 : vector<8x1xf32> to vector<8x128xf32>
    %117 = arith.addf %115, %116 : vector<8x128xf32>
    %cst_42 = arith.constant 1.000000e-01 : f32
    %118 = vector.broadcast %cst_42 : f32 to vector<8x128xf32>
    %119 = arith.mulf %118, %117 : vector<8x128xf32>
    %120 = arith.addf %0, %119 : vector<8x128xf32>
    %c0_43 = arith.constant 0 : index
    %c0_44 = arith.constant 0 : index
    %121 = vector.load %arg5[%c0_43, %c0_44] : memref<8x128xf32, #tpu.memory_space<vmem>>, vector<8x128xf32>
    tpu.vector_store %arg5[%c0_43, %c0_44], %120 {strides = array<i32>} : memref<8x128xf32, #tpu.memory_space<vmem>>, vector<8x128xf32>,
    return
  }
}

</mosaic_0001>

<llo_original>
// kernel: tpu_custom_call.1
$region0: #{tpu_custom_call.1}
  #allocation0 [shape = 'u32[]', space=smem, size = 0x4, offset = 0x4, fixed_abs, tag = 'smem constant byte address 0x4 - core index']
  #allocation1 [shape = 'u32[144,128]{1,0:T(1,128)}', space=vmem, size = 0x12000, scoped, tag = 'internal scratch']
  %s0 = inlined_call_operand.vmem [shape: f32[8,128], index: 0, kind: input, shape index: {}]
  %s1 = inlined_call_operand.hbm [shape: f32[8,24], index: 1, kind: input, shape index: {}]
  %s2 = inlined_call_operand.hbm [shape: f32[8,24], index: 2, kind: input, shape index: {}]
  %s3 = inlined_call_operand.vmem [shape: f32[8,24], index: 3, kind: input, shape index: {}]
  %s4 = inlined_call_operand.vmem [shape: f32[8,4], index: 4, kind: input, shape index: {}]
  %s5 = inlined_call_operand.hbm [shape: f32[8,128], index: 5, kind: output, shape index: {}]
  %s6 = sld [smem:[#allocation0]]
  $region38: #{tpu_custom_call.1} parent=0
    _
  %s8 = ssub.s32 1, %s6
  %s9 = scalar_select 0, %s8, %s6
  $region1: #{tpu_custom_call.1} parent=0
    #allocation2 [shape = 'u8[4096]{0}', space=vmem, size = 0x1000, scoped, tag = 'input window, operand 1, single buffered']
    #allocation3 [shape = 's32[1]{0}', space=sflag, size = 0x4, scoped, tag = 'scoped memory for tpu_custom_call.1']
    #allocation4 [shape = 's32[1]{0}', space=sflag, size = 0x4, scoped, tag = 'scoped memory for tpu_custom_call.1']
    #allocation5 [shape = 'u8[4096]{0}', space=vmem, size = 0x1000, scoped, tag = 'input window, operand 2, single buffered']
    #allocation6 [shape = 's32[1]{0}', space=sflag, size = 0x4, scoped, tag = 'scoped memory for tpu_custom_call.1']
    #allocation7 [shape = 'u8[4096]{0}', space=vmem, size = 0x1000, scoped, tag = 'output window, operand 0, single buffered']
    %10 = vsyncpa [#allocation3], 0
    %11 = vsyncpa [#allocation6], 0
    %12 = vsyncpa [#allocation4], 0
    // Predicated region
    $region2: #{tpu_custom_call.1} parent=1 // pred_check
      _
    $region3: #{tpu_custom_call.1} parent=1 // pred_check_branch
      %14 = sbr.rel (0) target = $region5
    $region4: #{tpu_custom_call.1} parent=1 // pred_region
      _
    $region5: #{tpu_custom_call.1} parent=1 // pred_fallthru
      _
    // Predicated region
    $region6: #{tpu_custom_call.1} parent=1 // pred_check
      _
    $region7: #{tpu_custom_call.1} parent=1 // pred_check_branch
      %16 = sbr.rel (0) target = $region9
    $region8: #{tpu_custom_call.1} parent=1 // pred_region
      %s18 = ssub.s32 128, 128
      %19 = vsyncadd [#allocation3], %s18
      %s21 = sshll.u32 [#allocation2], 4
      %s22 = int_to_ptr.vmem [resolvable:$true] %s21
      %24 = dma.hbm_to_vmem [thread:$0]  %s1, 128, %s22, [#allocation3]
    $region9: #{tpu_custom_call.1} parent=1 // pred_fallthru
      _
    // Predicated region
    $region10: #{tpu_custom_call.1} parent=1 // pred_check
      _
    $region11: #{tpu_custom_call.1} parent=1 // pred_check_branch
      %26 = sbr.rel (0) target = $region13
    $region12: #{tpu_custom_call.1} parent=1 // pred_region
      %s28 = ssub.s32 128, 128
      %29 = vsyncadd [#allocation6], %s28
      %s31 = sshll.u32 [#allocation5], 4
      %s32 = int_to_ptr.vmem [resolvable:$true] %s31
      %34 = dma.hbm_to_vmem [thread:$0]  %s2, 128, %s32, [#allocation6]
    $region13: #{tpu_custom_call.1} parent=1 // pred_fallthru
      _
    // Predicated region
    $region14: #{tpu_custom_call.1} parent=1 // pred_check
      _
    $region15: #{tpu_custom_call.1} parent=1 // pred_check_branch
      %36 = sbr.rel (0) target = $region17
    $region16: #{tpu_custom_call.1} parent=1 // pred_region
      _
    $region17: #{tpu_custom_call.1} parent=1 // pred_fallthru
      _
    // Predicated region
    $region18: #{tpu_custom_call.1} parent=1 // pred_check
      _
    $region19: #{tpu_custom_call.1} parent=1 // pred_check_branch
      %38 = sbr.rel (0) target = $region21
    $region20: #{tpu_custom_call.1} parent=1 // pred_region
      _
    $region21: #{tpu_custom_call.1} parent=1 // pred_fallthru
      _
    // Predicated region
    $region22: #{tpu_custom_call.1} parent=1 // pred_check
      _
    $region23: #{tpu_custom_call.1} parent=1 // pred_check_branch
      %40 = sbr.rel (0) target = $region25
    $region24: #{tpu_custom_call.1} parent=1 // pred_region
      %41 = dma.done [#allocation3], 128
    $region25: #{tpu_custom_call.1} parent=1 // pred_fallthru
      _
    // Predicated region
    $region26: #{tpu_custom_call.1} parent=1 // pred_check
      _
    $region27: #{tpu_custom_call.1} parent=1 // pred_check_branch
      %43 = sbr.rel (0) target = $region29
    $region28: #{tpu_custom_call.1} parent=1 // pred_region
      %44 = dma.done [#allocation6], 128
    $region29: #{tpu_custom_call.1} parent=1 // pred_fallthru
      _
    %v45 = vld [vmem:[%s0] sm:$0xff]
    %v46 = vlaneseq
    %v47 = vand.u32 %v46, 127
    %vm48 = vcmp.lt.s32.totalorder %v47, 0
    %v49 = vsub.s32 0, %v47
    %v50 = vsel %vm48, %v49, %v47
    %v51 = vshrl.u32 %v50, 4
    %v52 = vand.u32 %v50, 15
    %v53 = vsub.s32 0, %v52
    %v54 = vsel %vm48, %v53, %v52
    %vm55 = vcmp.ne.s32.totalorder %v54, 0
    %vm56 = vcmp.lt.s32.totalorder %v54, 0
    %vm57 = vmand %vm56, %vm55
    %v58 = vadd.s32 %v54, 16
    %v59 = vsel %vm57, %v58, %v54
    %vm60 = vcmp.ne.s32.totalorder %v59, 0
    %vm61 = vcmp.ne.s32.totalorder %v59, 15
    %vm62 = vcmp.lt.s32.totalorder %v47, 32
    %v63 = vld [vmem:[%s4] sm:$0xff]
    %v64 = vld [vmem:[#allocation2] sm:$0xff]
    %65 = vrot.lane.b32.xlu0 %v45, 1
    %v66 = vpop.permute.xlu0 %65
    %v67 = vsel %vm60, 1, 0
    %vm68 = vcmp.eq.s32.totalorder %v67, 1
    %v69 = vsel %vm68, %v66, 0.0
    %70 = vrot.lane.b32.xlu0 %v45, 127
    %v71 = vpop.permute.xlu0 %70
    %v72 = vsel %vm61, 1, 0
    %vm73 = vcmp.eq.s32.totalorder %v72, 1
    %v74 = vsel %vm73, %v71, 0.0
    %76 = vset.pattern.permute.xlu0 0
    %77 = vperm.xlu0 %76, %v63
    %v78 = vpop.permute.xlu0 %77
    %vm80 = vcmask 195584
    %v82 = vsel %vm80, %v64, 0
    %84 = vmatprep.subr.mxu0 0.0
    %85 = vmatpush1.msra.mxu0 0.0
    %86 = vmatprep.subr.mxu0 0.0
    %87 = vmatpush1.msra.mxu0 0.0
    %88 = vmatprep.subr.mxu0 0.0
    %89 = vmatpush1.msra.mxu0 0.0
    %90 = vmatprep.subr.mxu0 0.0
    %91 = vmatpush1.msra.mxu0 0.0
    %92 = vmatprep.subr.mxu0 0.0
    %93 = vmatpush1.msra.mxu0 0.0
    %94 = vmatprep.subr.mxu0 0.0
    %95 = vmatpush1.msra.mxu0 0.0
    %96 = vmatprep.subr.mxu0 0.0
    %97 = vmatpush1.msra.mxu0 0.0
    %98 = vmatprep.subr.mxu0 0.0
    %99 = vmatpush1.msra.mxu0 0.0
    %100 = vmatprep.subr.mxu0 0.0
    %101 = vmatpush1.msra.mxu0 0.0
    %102 = vmatprep.subr.mxu0 0.0
    %103 = vmatpush1.msra.mxu0 0.0
    %104 = vmatprep.subr.mxu0 0.0
    %105 = vmatpush1.msra.mxu0 0.0
    %106 = vmatprep.subr.mxu0 0.0
    %107 = vmatpush1.msra.mxu0 0.0
    %108 = vmatprep.subr.mxu0 0.0
    %109 = vmatpush1.msra.mxu0 0.0
    %110 = vmatprep.subr.mxu0 0.0
    %111 = vmatpush1.msra.mxu0 %v74
    %112 = vmatprep.subr.mxu0 0.0
    %113 = vmatpush1.msra.mxu0 %v45
    %114 = vmatprep.subr.mxu0 0.0
    %115 = vmatpush1.msra.mxu0 %v69
    %116 = vmatprep.subr.mxu0 0.0
    %117 = vmatpush2.msra.mxu0 0.0
    %118 = vmatprep.subr.mxu0 0.0
    %119 = vmatpush2.msra.mxu0 0.0
    %120 = vmatprep.subr.mxu0 0.0
    %121 = vmatpush2.msra.mxu0 0.0
    %122 = vmatprep.subr.mxu0 0.0
    %123 = vmatpush2.msra.mxu0 0.0
    %124 = vmatprep.subr.mxu0 0.0
    %125 = vmatpush2.msra.mxu0 0.0
    %126 = vmatprep.subr.mxu0 0.0
    %127 = vmatpush2.msra.mxu0 0.0
    %128 = vmatprep.subr.mxu0 0.0
    %129 = vmatpush2.msra.mxu0 0.0
    %130 = vmatprep.subr.mxu0 0.0
    %131 = vmatpush2.msra.mxu0 0.0
    %132 = vmatprep.subr.mxu0 0.0
    %133 = vmatpush2.msra.mxu0 0.0
    %134 = vmatprep.subr.mxu0 0.0
    %135 = vmatpush2.msra.mxu0 0.0
    %136 = vmatprep.subr.mxu0 0.0
    %137 = vmatpush2.msra.mxu0 0.0
    %138 = vmatprep.subr.mxu0 0.0
    %139 = vmatpush2.msra.mxu0 0.0
    %140 = vmatprep.subr.mxu0 0.0
    %141 = vmatpush2.msra.mxu0 0.0
    %142 = vmatprep.subr.mxu0 0.0
    %143 = vmatpush2.msra.mxu0 0.0
    %144 = vmatprep.subr.mxu0 0.0
    %145 = vmatpush2.msra.mxu0 0.0
    %146 = vmatprep.subr.mxu0 0.0
    %147 = vmatpush2.msra.mxu0 0.0
    %148 = vmatprep.mubr.f32.mxu0 0.0
    %149 = vmatmul.mubr.f32.gmra.mxu0 %v82
    %v150 = vpop.f32.mrf.mxu0
    %v151 = vadd.f32 %v78, %v150
    %v152 = vpop.f32.mrf.mxu0
    %153 = vdwg.mxu0
    %v154 = vld [vmem:[#allocation5] sm:$0xff]
    %155 = vrot.lane.b32.xlu0 %v151, 1
    %v156 = vpop.permute.xlu0 %155
    %v157 = vsel %vm68, %v156, 0.0
    %158 = vrot.lane.b32.xlu0 %v151, 127
    %v159 = vpop.permute.xlu0 %158
    %v160 = vsel %vm73, %v159, 0.0
    %v162 = vsel %vm80, %v154, 0
    %164 = vmatprep.subr.mxu0 0.0
    %165 = vmatpush1.msra.mxu0 0.0
    %166 = vmatprep.subr.mxu0 0.0
    %167 = vmatpush1.msra.mxu0 0.0
    %168 = vmatprep.subr.mxu0 0.0
    %169 = vmatpush1.msra.mxu0 0.0
    %170 = vmatprep.subr.mxu0 0.0
    %171 = vmatpush1.msra.mxu0 0.0
    %172 = vmatprep.subr.mxu0 0.0
    %173 = vmatpush1.msra.mxu0 0.0
    %174 = vmatprep.subr.mxu0 0.0
    %175 = vmatpush1.msra.mxu0 0.0
    %176 = vmatprep.subr.mxu0 0.0
    %177 = vmatpush1.msra.mxu0 0.0
    %178 = vmatprep.subr.mxu0 0.0
    %179 = vmatpush1.msra.mxu0 0.0
    %180 = vmatprep.subr.mxu0 0.0
    %181 = vmatpush1.msra.mxu0 0.0
    %182 = vmatprep.subr.mxu0 0.0
    %183 = vmatpush1.msra.mxu0 0.0
    %184 = vmatprep.subr.mxu0 0.0
    %185 = vmatpush1.msra.mxu0 0.0
    %186 = vmatprep.subr.mxu0 0.0
    %187 = vmatpush1.msra.mxu0 0.0
    %188 = vmatprep.subr.mxu0 0.0
    %189 = vmatpush1.msra.mxu0 0.0
    %190 = vmatprep.subr.mxu0 0.0
    %191 = vmatpush1.msra.mxu0 %v160
    %192 = vmatprep.subr.mxu0 0.0
    %193 = vmatpush1.msra.mxu0 %v151
    %194 = vmatprep.subr.mxu0 0.0
    %195 = vmatpush1.msra.mxu0 %v157
    %196 = vmatprep.subr.mxu0 0.0
    %197 = vmatpush2.msra.mxu0 0.0
    %198 = vmatprep.subr.mxu0 0.0
    %199 = vmatpush2.msra.mxu0 0.0
    %200 = vmatprep.subr.mxu0 0.0
    %201 = vmatpush2.msra.mxu0 0.0
    %202 = vmatprep.subr.mxu0 0.0
    %203 = vmatpush2.msra.mxu0 0.0
    %204 = vmatprep.subr.mxu0 0.0
    %205 = vmatpush2.msra.mxu0 0.0
    %206 = vmatprep.subr.mxu0 0.0
    %207 = vmatpush2.msra.mxu0 0.0
    %208 = vmatprep.subr.mxu0 0.0
    %209 = vmatpush2.msra.mxu0 0.0
    %210 = vmatprep.subr.mxu0 0.0
    %211 = vmatpush2.msra.mxu0 0.0
    %212 = vmatprep.subr.mxu0 0.0
    %213 = vmatpush2.msra.mxu0 0.0
    %214 = vmatprep.subr.mxu0 0.0
    %215 = vmatpush2.msra.mxu0 0.0
    %216 = vmatprep.subr.mxu0 0.0
    %217 = vmatpush2.msra.mxu0 0.0
    %218 = vmatprep.subr.mxu0 0.0
    %219 = vmatpush2.msra.mxu0 0.0
    %220 = vmatprep.subr.mxu0 0.0
    %221 = vmatpush2.msra.mxu0 0.0
    %222 = vmatprep.subr.mxu0 0.0
    %223 = vmatpush2.msra.mxu0 0.0
    %224 = vmatprep.subr.mxu0 0.0
    %225 = vmatpush2.msra.mxu0 0.0
    %226 = vmatprep.subr.mxu0 0.0
    %227 = vmatpush2.msra.mxu0 0.0
    %228 = vmatprep.mubr.f32.mxu0 0.0
    %229 = vmatmul.mubr.f32.gmra.mxu0 %v162
    %v230 = vpop.f32.mrf.mxu0
    %v231 = vadd.f32 0.0, %v230
    %v232 = vpop.f32.mrf.mxu0
    %233 = vdwg.mxu0
    %v234 = vsel %vm62, 1, 0
    %vm235 = vcmp.eq.s32.totalorder %v234, 1
    %v236 = vsel %vm235, %v231, 0.0
    %237 = vadd.xlane.f32.xlu0 %v236
    %v238 = vpop.xlane.xlu0 %237
    %v239 = vmul.f32 %v238, 0.03125
    %v240 = vmul.f32 %v236, %v236
    %241 = vadd.xlane.f32.xlu0 %v240
    %v242 = vpop.xlane.xlu0 %241
    %v243 = vmul.f32 %v242, 0.03125
    %v244 = vmul.f32 %v239, %v239
    %v245 = vsub.f32 %v243, %v244
    %v246 = vadd.f32 %v245, 1e-05
    %v247 = vrsqrt.pop %v246
    %v248 = vmul.f32 %v63, %v247
    %v249 = vmul.f32 %v239, %v248
    %251 = vrot.lane.b32.xlu0 %v249, 1
    %v252 = vpop.permute.xlu0 %251
    %v254 = vsub.f32 %v63, %v252
    %256 = vset.pattern.permute.xlu0 2
    %257 = vperm.xlu0 %256, %v248
    %v258 = vpop.permute.xlu0 %257
    %v260 = vmul.f32 %v231, %v258
    %262 = vset.pattern.permute.xlu0 3
    %263 = vperm.xlu0 %262, %v254
    %v264 = vpop.permute.xlu0 %263
    %v266 = vadd.f32 %v260, %v264
    %v267 = vxor.u32 %v266, 2147483648
    %v268 = vmul.f32 %v267, 1.442695
    %v269 = vpow.pop %v268
    %v270 = vadd.f32 %v269, 1.0
    %v271 = vrcp.pop %v270
    %v272 = vmul.f32 1.0, %v271
    %v273 = vmul.f32 %v266, %v272
    %v274 = vld [vmem:[%s3] sm:$0xff]
    %275 = vrot.lane.b32.xlu0 %v273, 1
    %v276 = vpop.permute.xlu0 %275
    %v277 = vsel %vm68, %v276, 0.0
    %278 = vrot.lane.b32.xlu0 %v273, 127
    %v279 = vpop.permute.xlu0 %278
    %v280 = vsel %vm73, %v279, 0.0
    %281 = vset.pattern.permute.xlu0 1
    %282 = vperm.xlu0 %281, %v63
    %v283 = vpop.permute.xlu0 %282
    %v286 = vsel %vm80, %v274, 0
    %288 = vmatprep.subr.mxu0 0.0
    %289 = vmatpush1.msra.mxu0 0.0
    %290 = vmatprep.subr.mxu0 0.0
    %291 = vmatpush1.msra.mxu0 0.0
    %292 = vmatprep.subr.mxu0 0.0
    %293 = vmatpush1.msra.mxu0 0.0
    %294 = vmatprep.subr.mxu0 0.0
    %295 = vmatpush1.msra.mxu0 0.0
    %296 = vmatprep.subr.mxu0 0.0
    %297 = vmatpush1.msra.mxu0 0.0
    %298 = vmatprep.subr.mxu0 0.0
    %299 = vmatpush1.msra.mxu0 0.0
    %300 = vmatprep.subr.mxu0 0.0
    %301 = vmatpush1.msra.mxu0 0.0
    %302 = vmatprep.subr.mxu0 0.0
    %303 = vmatpush1.msra.mxu0 0.0
    %304 = vmatprep.subr.mxu0 0.0
    %305 = vmatpush1.msra.mxu0 0.0
    %306 = vmatprep.subr.mxu0 0.0
    %307 = vmatpush1.msra.mxu0 0.0
    %308 = vmatprep.subr.mxu0 0.0
    %309 = vmatpush1.msra.mxu0 0.0
    %310 = vmatprep.subr.mxu0 0.0
    %311 = vmatpush1.msra.mxu0 0.0
    %312 = vmatprep.subr.mxu0 0.0
    %313 = vmatpush1.msra.mxu0 0.0
    %314 = vmatprep.subr.mxu0 0.0
    %315 = vmatpush1.msra.mxu0 %v280
    %316 = vmatprep.subr.mxu0 0.0
    %317 = vmatpush1.msra.mxu0 %v273
    %318 = vmatprep.subr.mxu0 0.0
    %319 = vmatpush1.msra.mxu0 %v277
    %320 = vmatprep.subr.mxu0 0.0
    %321 = vmatpush2.msra.mxu0 0.0
    %322 = vmatprep.subr.mxu0 0.0
    %323 = vmatpush2.msra.mxu0 0.0
    %324 = vmatprep.subr.mxu0 0.0
    %325 = vmatpush2.msra.mxu0 0.0
    %326 = vmatprep.subr.mxu0 0.0
    %327 = vmatpush2.msra.mxu0 0.0
    %328 = vmatprep.subr.mxu0 0.0
    %329 = vmatpush2.msra.mxu0 0.0
    %330 = vmatprep.subr.mxu0 0.0
    %331 = vmatpush2.msra.mxu0 0.0
    %332 = vmatprep.subr.mxu0 0.0
    %333 = vmatpush2.msra.mxu0 0.0
    %334 = vmatprep.subr.mxu0 0.0
    %335 = vmatpush2.msra.mxu0 0.0
    %336 = vmatprep.subr.mxu0 0.0
    %337 = vmatpush2.msra.mxu0 0.0
    %338 = vmatprep.subr.mxu0 0.0
    %339 = vmatpush2.msra.mxu0 0.0
    %340 = vmatprep.subr.mxu0 0.0
    %341 = vmatpush2.msra.mxu0 0.0
    %342 = vmatprep.subr.mxu0 0.0
    %343 = vmatpush2.msra.mxu0 0.0
    %344 = vmatprep.subr.mxu0 0.0
    %345 = vmatpush2.msra.mxu0 0.0
    %346 = vmatprep.subr.mxu0 0.0
    %347 = vmatpush2.msra.mxu0 0.0
    %348 = vmatprep.subr.mxu0 0.0
    %349 = vmatpush2.msra.mxu0 0.0
    %350 = vmatprep.subr.mxu0 0.0
    %351 = vmatpush2.msra.mxu0 0.0
    %352 = vmatprep.mubr.f32.mxu0 0.0
    %353 = vmatmul.mubr.f32.gmra.mxu0 %v286
    %v354 = vpop.f32.mrf.mxu0
    %v355 = vadd.f32 %v283, %v354
    %v356 = vpop.f32.mrf.mxu0
    %357 = vdwg.mxu0
    %v358 = vmul.f32 %v355, 0.1
    %v359 = vadd.f32 %v45, %v358
    %360 = vst [vmem:[#allocation7] sm:$0xff] %v359
    // Predicated region
    $region30: #{tpu_custom_call.1} parent=1 // pred_check
      _
    $region31: #{tpu_custom_call.1} parent=1 // pred_check_branch
      %362 = sbr.rel (0) target = $region33
    $region32: #{tpu_custom_call.1} parent=1 // pred_region
      %s364 = ssub.s32 128, 128
      %365 = vsyncadd [#allocation4], %s364
      %s367 = sshll.u32 [#allocation7], 4
      %s368 = int_to_ptr.vmem [resolvable:$true] %s367
      %370 = dma.vmem_to_hbm [thread:$0]  %s368, 128, %s5, [#allocation4]
    $region33: #{tpu_custom_call.1} parent=1 // pred_fallthru
      _
    // Predicated region
    $region34: #{tpu_custom_call.1} parent=1 // pred_check
      _
    $region35: #{tpu_custom_call.1} parent=1 // pred_check_branch
      %372 = sbr.rel (0) target = $region37
    $region36: #{tpu_custom_call.1} parent=1 // pred_region
      %373 = dma.done [#allocation4], 128
    $region37: #{tpu_custom_call.1} parent=1 // pred_fallthru
      _
    %374 = vsyncpa [#allocation3], 1
    %375 = vsyncpa [#allocation6], 1
    %376 = vsyncpa [#allocation4], 1

</llo_original>
